<compile_context>
chip_gen: v6e
topology: v6e:2x2x1
jax: 0.10.0
libtpu: 0.0.40
codegen_flags: <defaults>
</compile_context>

<pallas_src>
import jax
import jax.numpy as jnp
from jax import lax
from jax.experimental import pallas as pl
from jax.experimental.pallas import tpu as pltpu


def _round_up(x, m):
    return ((x + m - 1) // m) * m


def _sampler_kernel_single_k(h_ref, w_ref, o_ref):
    # h_ref: (tm, H) hidden tile; w_ref: (tn, H) weight tile (native (V, H) layout).
    h = h_ref[...]
    w = w_ref[...].astype(h.dtype)                     # mirrors `.to(hidden.dtype)` in VMEM
    o_ref[...] = lax.dot_general(
        h, w,
        dimension_numbers=(((1,), (1,)), ((), ())),    # contract H with H -> (tm, tn)
        preferred_element_type=jnp.float32,
    ).astype(o_ref.dtype)


def _sampler_kernel_multi_k(h_ref, w_ref, o_ref, acc_ref):
    # Same as above but the hidden dim is split over grid axis 2; f32 accumulator scratch
    # stays resident in VMEM across the K axis.
    k = pl.program_id(2)

    @pl.when(k == 0)
    def _():
        acc_ref[...] = jnp.zeros_like(acc_ref)

    h = h_ref[...]
    w = w_ref[...].astype(h.dtype)
    acc_ref[...] += lax.dot_general(
        h, w,
        dimension_numbers=(((1,), (1,)), ((), ())),
        preferred_element_type=jnp.float32,
    )

    @pl.when(k == pl.num_programs(2) - 1)
    def _():
        o_ref[...] = acc_ref[...].astype(o_ref.dtype)


def _pick_tiles(M, V, H, in_bytes, out_bytes, budget):
    """Pick (tm, tn, tk) that keep the MXU fed while fitting the VMEM budget."""
    # Row tile: one full MXU pass worth of rows (or all of them if M is small).
    tm = M if M <= 256 else 256

    # Prefer a single K step (whole hidden dim resident): with the vocab axis outermost
    # this lets the pipeline stream the big weight from HBM exactly once per call.
    tk_cands = [H] + [c for c in (2048, 1024, 512, 256) if c < H and H % c == 0]
    # Lane-dense vocab tiles (cdiv grid handles a ragged tail tile).
    tn_cands = [c for c in (4096, 2048, 1024, 512, 256, 128) if c <= V] or [V]

    for tk in tk_cands:
        n_k = H // tk
        for tn in tn_cands:
            vmem = (2 * (tm * tk + tn * tk) * in_bytes   # double-buffered inputs
                    + 2 * tm * tn * out_bytes)           # double-buffered output
            if n_k > 1:
                vmem += tm * tn * 4                      # f32 accumulator scratch
            if vmem <= budget:
                return tm, tn, tk
    # TODO(synk): a very large H with no power-of-two factor may exceed the VMEM budget.
    return tm, tn_cands[-1], tk_cands[-1]


def sampler_pipeline_layer(inputs, weight, *, tm=None, tn=None, tk=None,
                           vmem_budget_bytes=30 * 1024 * 1024):
    """JAX/Pallas equivalent of SamplerPipelineLayer.forward.

    inputs = (hidden_states, labels); hidden_states: (B, S, H); labels passed through.
    weight: (V, H) embedder weight (same layout as nn.Embedding.weight).
    Returns (logits, labels) with logits: (B, S, V) in hidden_states.dtype.
    """
    hidden_states, labels = inputs
    B, S, H = hidden_states.shape
    V, H_w = weight.shape
    assert H_w == H, "weight must be (vocab, hidden)"

    out_dtype = hidden_states.dtype
    M = B * S
    in_bytes = jnp.dtype(hidden_states.dtype).itemsize
    out_bytes = jnp.dtype(out_dtype).itemsize

    a_tm, a_tn, a_tk = _pick_tiles(M, V, H, in_bytes, out_bytes, vmem_budget_bytes)
    tm = tm or a_tm
    tn = tn or a_tn
    tk = tk or a_tk
    # Only the reduction (hidden) axis must divide exactly — ragged M/V tiles are masked
    # by Pallas at the boundary, but ragged K would add garbage into valid outputs.
    assert H % tk == 0, "hidden tile must divide H"

    n_i = pl.cdiv(M, tm)   # row tiles
    n_j = pl.cdiv(V, tn)   # vocab tiles
    n_k = H // tk          # reduction steps

    h2d = hidden_states.reshape(M, H)

    if n_k == 1:
        # Vocab outermost: the weight block index depends only on j, so it stays resident
        # in VMEM across the whole inner row loop -> weight read from HBM exactly once.
        grid_spec = pltpu.PrefetchScalarGridSpec(
            num_scalar_prefetch=0,
            grid=(n_j, n_i),
            in_specs=[
                pl.BlockSpec((tm, tk), lambda j, i: (i, 0)),   # hidden tile
                pl.BlockSpec((tn, tk), lambda j, i: (j, 0)),   # weight tile, native (V,H)
            ],
            out_specs=pl.BlockSpec((tm, tn), lambda j, i: (i, j)),
        )
        kernel = _sampler_kernel_single_k
        dim_sem = ("parallel", "parallel")
    else:
        grid_spec = pltpu.PrefetchScalarGridSpec(
            num_scalar_prefetch=0,
            grid=(n_j, n_i, n_k),
            in_specs=[
                pl.BlockSpec((tm, tk), lambda j, i, k: (i, k)),
                pl.BlockSpec((tn, tk), lambda j, i, k: (j, k)),
            ],
            out_specs=pl.BlockSpec((tm, tn), lambda j, i, k: (i, j)),
            scratch_shapes=[pltpu.VMEM((tm, tn), jnp.float32)],
        )
        kernel = _sampler_kernel_multi_k
        dim_sem = ("parallel", "parallel", "arbitrary")

    logits_2d = pl.pallas_call(
        kernel,
        out_shape=jax.ShapeDtypeStruct((M, V), out_dtype),
        grid_spec=grid_spec,
        compiler_params=pltpu.CompilerParams(
            dimension_semantics=dim_sem,
            vmem_limit_bytes=48 * 1024 * 1024,   # headroom, still below v7x's 64 MiB
        ),
    )(h2d, weight)

    logits = logits_2d.reshape(B, S, V)
    return (logits, labels)


if __name__ == "__main__":
    # Small deterministic setup consistent with the module:
    # embedder.weight has shape (vocab_size, hidden_size).
    B, S, H, V = 2, 8, 32, 256

    key = jax.random.PRNGKey(0)
    k_h, k_w, k_l = jax.random.split(key, 3)

    hidden_states = jax.random.normal(k_h, (B, S, H), dtype=jnp.float32)
    weight = jax.random.normal(k_w, (V, H), dtype=jnp.float32) * 0.02
    labels = jax.random.randint(k_l, (B, S), 0, V, dtype=jnp.int32)

    logits, labels_out = sampler_pipeline_layer((hidden_states, labels), weight)
    jax.block_until_ready(logits)
    jax.block_until_ready(labels_out)

    # Reference: plain JAX matmul (same semantics as torch.matmul with weight.t()).
    ref = jnp.einsum("bsh,vh->bsv", hidden_states, weight.astype(hidden_states.dtype))
    assert logits.shape == (B, S, V)
    assert logits.dtype == hidden_states.dtype
    assert jnp.allclose(logits, ref, atol=1e-2, rtol=1e-2)
    assert jnp.array_equal(labels_out, labels)

    print("KERNEL_OK")
</pallas_src>

<mosaic_0001>
module attributes {stable_mosaic.version = 11 : i64} {
  func.func @_sampler_kernel_single_k(%arg0: i32, %arg1: i32, %arg2: memref<16x32xf32, #tpu.memory_space<vmem>>, %arg3: memref<256x32xf32, #tpu.memory_space<vmem>>, %arg4: memref<16x256xf32, #tpu.memory_space<vmem>>) attributes {dimension_semantics = [#tpu.dimension_semantics<parallel>, #tpu.dimension_semantics<parallel>], iteration_bounds = array<i64: 1, 1>, scalar_prefetch = 0 : i64, scratch_operands = 0 : i64, tpu.core_type = #tpu.core_type<tc>, window_params = [{transform_indices = @transform_0, window_bounds = array<i64: 16, 32>}, {transform_indices = @transform_1, window_bounds = array<i64: 256, 32>}, {transform_indices = @transform_2, window_bounds = array<i64: 16, 256>}]} {
    %c0 = arith.constant 0 : index
    %c0_0 = arith.constant 0 : index
    %0 = vector.load %arg2[%c0, %c0_0] : memref<16x32xf32, #tpu.memory_space<vmem>>, vector<16x32xf32>
    %c0_1 = arith.constant 0 : index
    %c0_2 = arith.constant 0 : index
    %1 = vector.load %arg3[%c0_1, %c0_2] : memref<256x32xf32, #tpu.memory_space<vmem>>, vector<256x32xf32>
    %cst = arith.constant dense<0.000000e+00> : vector<16x256xf32>
    %2 = tpu.matmul %0, %1, %cst {dimension_numbers = #tpu.dot_dimension_numbers<[1], [1], [0], [0], [0, 0, 1, 0], [], []>} : vector<16x32xf32>, vector<256x32xf32>, vector<16x256xf32> -> vector<16x256xf32>
    %c0_3 = arith.constant 0 : index
    %c0_4 = arith.constant 0 : index
    %3 = vector.load %arg4[%c0_3, %c0_4] : memref<16x256xf32, #tpu.memory_space<vmem>>, vector<16x256xf32>
    tpu.vector_store %arg4[%c0_3, %c0_4], %2 {strides = array<i32>} : memref<16x256xf32, #tpu.memory_space<vmem>>, vector<16x256xf32>,
    return
  }
  func.func @transform_0(%arg0: i32, %arg1: i32) -> (i32, i32) {
    %c0_i32 = arith.constant 0 : i32
    %c0_i32_0 = arith.constant 0 : i32
    return %arg1, %c0_i32 : i32, i32
  }
  func.func @transform_1(%arg0: i32, %arg1: i32) -> (i32, i32) {
    %c0_i32 = arith.constant 0 : i32
    %c0_i32_0 = arith.constant 0 : i32
    return %arg0, %c0_i32 : i32, i32
  }
  func.func @transform_2(%arg0: i32, %arg1: i32) -> (i32, i32) {
    %c0_i32 = arith.constant 0 : i32
    return %arg1, %arg0 : i32, i32
  }
}

</mosaic_0001>

<llo_original>
// kernel: tpu_custom_call.1
$region0: #{tpu_custom_call.1}
  #allocation0 [shape = 'u32[]', space=smem, size = 0x4, offset = 0x4, fixed_abs, tag = 'smem constant byte address 0x4 - core index']
  #allocation1 [shape = 'u32[144,128]{1,0:T(1,128)}', space=vmem, size = 0x12000, scoped, tag = 'internal scratch']
  %s0 = inlined_call_operand.vmem [shape: f32[16,32], index: 0, kind: input, shape index: {}]
  %s1 = inlined_call_operand.vmem [shape: f32[256,32], index: 1, kind: input, shape index: {}]
  %s2 = inlined_call_operand.hbm [shape: f32[16,256], index: 2, kind: output, shape index: {}]
  %s3 = sld [smem:[#allocation0]]
  $region18: #{tpu_custom_call.1} parent=0
    _
  %s5 = ssub.s32 1, %s3
  %s6 = scalar_select 0, %s5, %s3
  $region1: #{tpu_custom_call.1} parent=0
    #allocation2 [shape = 'u8[16384]{0}', space=vmem, size = 0x4000, scoped, tag = 'output window, operand 0, single buffered']
    #allocation3 [shape = 's32[1]{0}', space=sflag, size = 0x4, scoped, tag = 'scoped memory for tpu_custom_call.1']
    %7 = vsyncpa [#allocation3], 0
    // Predicated region
    $region2: #{tpu_custom_call.1} parent=1 // pred_check
      _
    $region3: #{tpu_custom_call.1} parent=1 // pred_check_branch
      %9 = sbr.rel (0) target = $region5
    $region4: #{tpu_custom_call.1} parent=1 // pred_region
      _
    $region5: #{tpu_custom_call.1} parent=1 // pred_fallthru
      _
    // Predicated region
    $region6: #{tpu_custom_call.1} parent=1 // pred_check
      _
    $region7: #{tpu_custom_call.1} parent=1 // pred_check_branch
      %11 = sbr.rel (0) target = $region9
    $region8: #{tpu_custom_call.1} parent=1 // pred_region
      _
    $region9: #{tpu_custom_call.1} parent=1 // pred_fallthru
      _
    %v12 = vld [vmem:[%s0] sm:$0xff]
    %v13 = vld [vmem:[%s0 + $0x8] sm:$0xff]
    %v14 = vld [vmem:[%s1] sm:$0xff]
    %v15 = vld [vmem:[%s1 + $0x8] sm:$0xff]
    %v16 = vld [vmem:[%s1 + $0x10] sm:$0xff]
    %v17 = vld [vmem:[%s1 + $0x18] sm:$0xff]
    %v18 = vld [vmem:[%s1 + $0x20] sm:$0xff]
    %v19 = vld [vmem:[%s1 + $0x28] sm:$0xff]
    %v20 = vld [vmem:[%s1 + $0x30] sm:$0xff]
    %v21 = vld [vmem:[%s1 + $0x38] sm:$0xff]
    %v22 = vld [vmem:[%s1 + $0x40] sm:$0xff]
    %v23 = vld [vmem:[%s1 + $0x48] sm:$0xff]
    %v24 = vld [vmem:[%s1 + $0x50] sm:$0xff]
    %v25 = vld [vmem:[%s1 + $0x58] sm:$0xff]
    %v26 = vld [vmem:[%s1 + $0x60] sm:$0xff]
    %v27 = vld [vmem:[%s1 + $0x68] sm:$0xff]
    %v28 = vld [vmem:[%s1 + $0x70] sm:$0xff]
    %v29 = vld [vmem:[%s1 + $0x78] sm:$0xff]
    %v30 = vld [vmem:[%s1 + $0x80] sm:$0xff]
    %v31 = vld [vmem:[%s1 + $0x88] sm:$0xff]
    %v32 = vld [vmem:[%s1 + $0x90] sm:$0xff]
    %v33 = vld [vmem:[%s1 + $0x98] sm:$0xff]
    %v34 = vld [vmem:[%s1 + $0xa0] sm:$0xff]
    %v35 = vld [vmem:[%s1 + $0xa8] sm:$0xff]
    %v36 = vld [vmem:[%s1 + $0xb0] sm:$0xff]
    %v37 = vld [vmem:[%s1 + $0xb8] sm:$0xff]
    %v38 = vld [vmem:[%s1 + $0xc0] sm:$0xff]
    %v39 = vld [vmem:[%s1 + $0xc8] sm:$0xff]
    %v40 = vld [vmem:[%s1 + $0xd0] sm:$0xff]
    %v41 = vld [vmem:[%s1 + $0xd8] sm:$0xff]
    %v42 = vld [vmem:[%s1 + $0xe0] sm:$0xff]
    %v43 = vld [vmem:[%s1 + $0xe8] sm:$0xff]
    %v44 = vld [vmem:[%s1 + $0xf0] sm:$0xff]
    %v45 = vld [vmem:[%s1 + $0xf8] sm:$0xff]
    %vm46 = vcmask 261120
    %v48 = vsel %vm46, %v12, 0
    %v51 = vsel %vm46, %v13, 0
    %v54 = vsel %vm46, %v14, 0
    %v57 = vsel %vm46, %v15, 0
    %v60 = vsel %vm46, %v16, 0
    %v63 = vsel %vm46, %v17, 0
    %v66 = vsel %vm46, %v18, 0
    %v69 = vsel %vm46, %v19, 0
    %v72 = vsel %vm46, %v20, 0
    %v75 = vsel %vm46, %v21, 0
    %v78 = vsel %vm46, %v22, 0
    %v81 = vsel %vm46, %v23, 0
    %v84 = vsel %vm46, %v24, 0
    %v87 = vsel %vm46, %v25, 0
    %v90 = vsel %vm46, %v26, 0
    %v93 = vsel %vm46, %v27, 0
    %v96 = vsel %vm46, %v28, 0
    %v99 = vsel %vm46, %v29, 0
    %v102 = vsel %vm46, %v30, 0
    %v105 = vsel %vm46, %v31, 0
    %v108 = vsel %vm46, %v32, 0
    %v111 = vsel %vm46, %v33, 0
    %v114 = vsel %vm46, %v34, 0
    %v117 = vsel %vm46, %v35, 0
    %v120 = vsel %vm46, %v36, 0
    %v123 = vsel %vm46, %v37, 0
    %v126 = vsel %vm46, %v38, 0
    %v129 = vsel %vm46, %v39, 0
    %v132 = vsel %vm46, %v40, 0
    %v135 = vsel %vm46, %v41, 0
    %v138 = vsel %vm46, %v42, 0
    %v141 = vsel %vm46, %v43, 0
    %v144 = vsel %vm46, %v44, 0
    %v147 = vsel %vm46, %v45, 0
    %149 = vmatprep.subr.mxu0 0.0
    %150 = vmatpush1.xpose.msra.mxu0 %v99
    %151 = vmatprep.subr.mxu0 0.0
    %152 = vmatpush1.xpose.msra.mxu0 %v96
    %153 = vmatprep.subr.mxu0 0.0
    %154 = vmatpush1.xpose.msra.mxu0 %v93
    %155 = vmatprep.subr.mxu0 0.0
    %156 = vmatpush1.xpose.msra.mxu0 %v90
    %157 = vmatprep.subr.mxu0 0.0
    %158 = vmatpush1.xpose.msra.mxu0 %v87
    %159 = vmatprep.subr.mxu0 0.0
    %160 = vmatpush1.xpose.msra.mxu0 %v84
    %161 = vmatprep.subr.mxu0 0.0
    %162 = vmatpush1.xpose.msra.mxu0 %v81
    %163 = vmatprep.subr.mxu0 0.0
    %164 = vmatpush1.xpose.msra.mxu0 %v78
    %165 = vmatprep.subr.mxu0 0.0
    %166 = vmatpush1.xpose.msra.mxu0 %v75
    %167 = vmatprep.subr.mxu0 0.0
    %168 = vmatpush1.xpose.msra.mxu0 %v72
    %169 = vmatprep.subr.mxu0 0.0
    %170 = vmatpush1.xpose.msra.mxu0 %v69
    %171 = vmatprep.subr.mxu0 0.0
    %172 = vmatpush1.xpose.msra.mxu0 %v66
    %173 = vmatprep.subr.mxu0 0.0
    %174 = vmatpush1.xpose.msra.mxu0 %v63
    %175 = vmatprep.subr.mxu0 0.0
    %176 = vmatpush1.xpose.msra.mxu0 %v60
    %177 = vmatprep.subr.mxu0 0.0
    %178 = vmatpush1.xpose.msra.mxu0 %v57
    %179 = vmatprep.subr.mxu0 0.0
    %180 = vmatpush1.xpose.msra.mxu0 %v54
    %181 = vmatprep.subr.mxu0 0.0
    %182 = vmatpush2.xpose.msra.mxu0 %v147
    %183 = vmatprep.subr.mxu0 0.0
    %184 = vmatpush2.xpose.msra.mxu0 %v144
    %185 = vmatprep.subr.mxu0 0.0
    %186 = vmatpush2.xpose.msra.mxu0 %v141
    %187 = vmatprep.subr.mxu0 0.0
    %188 = vmatpush2.xpose.msra.mxu0 %v138
    %189 = vmatprep.subr.mxu0 0.0
    %190 = vmatpush2.xpose.msra.mxu0 %v135
    %191 = vmatprep.subr.mxu0 0.0
    %192 = vmatpush2.xpose.msra.mxu0 %v132
    %193 = vmatprep.subr.mxu0 0.0
    %194 = vmatpush2.xpose.msra.mxu0 %v129
    %195 = vmatprep.subr.mxu0 0.0
    %196 = vmatpush2.xpose.msra.mxu0 %v126
    %197 = vmatprep.subr.mxu0 0.0
    %198 = vmatpush2.xpose.msra.mxu0 %v123
    %199 = vmatprep.subr.mxu0 0.0
    %200 = vmatpush2.xpose.msra.mxu0 %v120
    %201 = vmatprep.subr.mxu0 0.0
    %202 = vmatpush2.xpose.msra.mxu0 %v117
    %203 = vmatprep.subr.mxu0 0.0
    %204 = vmatpush2.xpose.msra.mxu0 %v114
    %205 = vmatprep.subr.mxu0 0.0
    %206 = vmatpush2.xpose.msra.mxu0 %v111
    %207 = vmatprep.subr.mxu0 0.0
    %208 = vmatpush2.xpose.msra.mxu0 %v108
    %209 = vmatprep.subr.mxu0 0.0
    %210 = vmatpush2.xpose.msra.mxu0 %v105
    %211 = vmatprep.subr.mxu0 0.0
    %212 = vmatpush2.xpose.msra.mxu0 %v102
    %213 = vmatprep.mubr.f32.mxu0 0.0
    %214 = vmatmul.mubr.f32.gmra.mxu0 %v48
    %v215 = vpop.f32.mrf.mxu0
    %v216 = vadd.f32 0.0, %v215
    %v217 = vpop.f32.mrf.mxu0
    %v218 = vadd.f32 0.0, %v217
    %219 = vmatprep.mubr.f32.mxu0 0.0
    %220 = vmatmul.mubr.f32.gmra.mxu0 %v51
    %v221 = vpop.f32.mrf.mxu0
    %v222 = vadd.f32 0.0, %v221
    %v223 = vpop.f32.mrf.mxu0
    %v224 = vadd.f32 0.0, %v223
    %225 = vdwg.mxu0
    %226 = vst [vmem:[#allocation2] sm:$0xff] %v216
    %227 = vst [vmem:[#allocation2 + $0x8] sm:$0xff] %v218
    %228 = vst [vmem:[#allocation2 + $0x10] sm:$0xff] %v222
    %229 = vst [vmem:[#allocation2 + $0x18] sm:$0xff] %v224
    // Predicated region
    $region10: #{tpu_custom_call.1} parent=1 // pred_check
      _
    $region11: #{tpu_custom_call.1} parent=1 // pred_check_branch
      %231 = sbr.rel (0) target = $region13
    $region12: #{tpu_custom_call.1} parent=1 // pred_region
      %s233 = ssub.s32 512, 512
      %234 = vsyncadd [#allocation3], %s233
      %s235 = sshll.u32 [#allocation2], 4
      %s236 = int_to_ptr.vmem [resolvable:$true] %s235
      %241 = dma.vmem_to_hbm [thread:$0]  %s236, 512, %s2, [#allocation3], 256, 256, 16
    $region13: #{tpu_custom_call.1} parent=1 // pred_fallthru
      _
    // Predicated region
    $region14: #{tpu_custom_call.1} parent=1 // pred_check
      _
    $region15: #{tpu_custom_call.1} parent=1 // pred_check_branch
      %243 = sbr.rel (0) target = $region17
    $region16: #{tpu_custom_call.1} parent=1 // pred_region
      %244 = dma.done [#allocation3], 512
    $region17: #{tpu_custom_call.1} parent=1 // pred_fallthru
      _
    %245 = vsyncpa [#allocation3], 1

</llo_original>
